<compile_context>
chip_gen: v7x
topology: tpu7x:2x2x1
jax: 0.10.0
libtpu: 0.0.40
codegen_flags: <defaults>
</compile_context>

<pallas_src>
import math
from functools import partial

import jax
import jax.numpy as jnp
from jax.experimental import pallas as pl
from jax.experimental.pallas import tpu as pltpu


# ---------------------------------------------------------------------------
# Kernel
# ---------------------------------------------------------------------------
def _decoder_kernel(x_ref, w_ref, b_ref, out_ref, *, L, use_slice):
    """One batch tile of the fused decoder.

    x_ref:   (TILE, WF)  packed input rows (WF = P*F)
    w_ref:   (WF, WO)    block-diagonal replicated [W_mu | W_logvar] (WO = P*2L)
    b_ref:   (1, WO)     P-times tiled [b_mu | b_logvar], f32
    out_ref: (TILE, WO)  packed [mu | softplus(logvar)] slabs
    """
    # Single MXU matmul, f32 accumulation; operands stay in native dtype.
    y = jnp.dot(x_ref[...], w_ref[...], preferred_element_type=jnp.float32)
    y = y + b_ref[...]

    if use_slice:
        # P == 1 and L % 128 == 0: static lane-aligned slices, softplus only on
        # the logvar half (halves the transcendental work).
        out_ref[:, :L] = y[:, :L].astype(out_ref.dtype)
        out_ref[:, L:] = jax.nn.softplus(y[:, L:]).astype(out_ref.dtype)
    else:
        # Packed layout: within each 2L-wide slab, columns >= L are the logvar
        # half.  Select by lane index so the store stays one unmasked slab.
        col = jax.lax.broadcasted_iota(jnp.int32, y.shape, dimension=1)
        is_scale = (col % (2 * L)) >= L
        out_ref[...] = jnp.where(is_scale, jax.nn.softplus(y), y).astype(out_ref.dtype)


# ---------------------------------------------------------------------------
# Parameter preparation (hoisted out of the hot path; do this once)
# ---------------------------------------------------------------------------
def prepare_decoder_params(w_mu, b_mu, w_lv, b_lv, *, max_pack_width=512):
    """Fuses the two Linear layers and builds the lane-dense packed weight.

    w_mu, w_lv: (F, L)   (transposed vs. PyTorch, so the kernel does X @ W)
    b_mu, b_lv: (L,)
    """
    F, L = w_mu.shape
    two_l = 2 * L

    w_cat = jnp.concatenate([w_mu, w_lv], axis=1)          # (F, 2L)
    b_cat = jnp.concatenate([b_mu, b_lv], axis=0)          # (2L,)

    # Pack factor P: smallest P so that P*F and P*2L are both lane-dense
    # (multiples of 128), as long as the replicated weight stays small.
    p_in = 128 // math.gcd(F, 128)
    p_out = 128 // math.gcd(two_l, 128)
    cand = (p_in * p_out) // math.gcd(p_in, p_out)          # lcm
    P = 1
    if cand > 1 and cand * F <= max_pack_width and cand * two_l <= max_pack_width:
        P = cand

    if P > 1:
        # Block-diagonal replication: packed row [x_0 | ... | x_{P-1}] @ w_big
        # = [x_0 @ W_cat | ... | x_{P-1} @ W_cat].
        w_big = jnp.kron(jnp.eye(P, dtype=w_cat.dtype), w_cat)  # (P*F, P*2L)
        b_big = jnp.tile(b_cat, P)                               # (P*2L,)
    else:
        w_big, b_big = w_cat, b_cat

    return {
        "w": w_big,
        "b": b_big.astype(jnp.float32).reshape(1, -1),
        "F": F,
        "L": L,
        "P": P,
    }


# ---------------------------------------------------------------------------
# Tiling
# ---------------------------------------------------------------------------
_TILE_VMEM_BUDGET = 16 * 1024 * 1024    # double-buffered x + out tiles
_MAX_TILE_PACKED_ROWS = 4096


def _round_up(n, m):
    return ((n + m - 1) // m) * m


def _choose_tiling(batch, pack, row_bytes):
    """Returns (tile_rows, num_steps, padded_packed_rows) in packed-row units."""
    pb = pl.cdiv(batch, pack)

    cap = (_TILE_VMEM_BUDGET // (2 * row_bytes)) // 8 * 8
    cap = max(8, min(_MAX_TILE_PACKED_ROWS, cap))

    nsteps = max(1, pl.cdiv(pb, cap))
    if nsteps == 1 and pb >= 16:
        # Give v7x's two TensorCores something each to do (harmless elsewhere:
        # one extra ~0.35us grid step).
        nsteps = 2

    if nsteps == 1:
        tile = pb                       # block == full array dim, no 8-round-up
    else:
        tile = _round_up(pl.cdiv(pb, nsteps), 8)

    pb_pad = nsteps * tile
    return tile, nsteps, pb_pad


# ---------------------------------------------------------------------------
# Wrapper
# ---------------------------------------------------------------------------
def normal_dist_decoder(x, params):
    """Returns (loc, scale) parameterizing Normal(loc, scale).

    x:      (B, F)
    params: output of prepare_decoder_params()
    """
    B, F = x.shape
    assert F == params["F"], "feature dim mismatch"
    L, P = params["L"], params["P"]
    two_l = 2 * L
    w, b = params["w"], params["b"]
    wf, wo = w.shape                                 # (P*F, P*2L)

    out_dtype = x.dtype
    row_bytes = wf * x.dtype.itemsize + wo * jnp.dtype(out_dtype).itemsize
    tile, nsteps, pb_pad = _choose_tiling(B, P, row_bytes)
    b_pad = pb_pad * P

    if b_pad != B:
        # Minimal padding only (at most a few sublane rows / one balanced-tile
        # remainder), not a round-up to a fixed large tile.
        x_in = jnp.zeros((b_pad, F), x.dtype).at[:B].set(x)
    else:
        x_in = x
    x_packed = x_in.reshape(pb_pad, wf)              # free row-major reshape

    kernel = partial(_decoder_kernel, L=L, use_slice=(P == 1 and L % 128 == 0))

    out_packed = pl.pallas_call(
        kernel,
        out_shape=jax.ShapeDtypeStruct((pb_pad, wo), out_dtype),
        grid_spec=pltpu.PrefetchScalarGridSpec(
            num_scalar_prefetch=0,
            grid=(nsteps,),
            in_specs=[
                pl.BlockSpec((tile, wf), lambda i: (i, 0)),   # packed x tile
                pl.BlockSpec((wf, wo), lambda i: (0, 0)),     # weights resident
                pl.BlockSpec((1, wo), lambda i: (0, 0)),      # bias resident
            ],
            out_specs=pl.BlockSpec((tile, wo), lambda i: (i, 0)),
        ),
        compiler_params=pltpu.CompilerParams(
            dimension_semantics=("parallel",),
            vmem_limit_bytes=32 * 1024 * 1024,
        ),
    )(x_packed, w, b)

    out = out_packed.reshape(b_pad, two_l)[:B]       # free reshape, cheap slice
    loc = out[:, :L]
    scale = out[:, L:]
    # TODO(synk): torch.distributions.Normal object itself has no Pallas
    # equivalent; we return its (loc, scale) parameters.
    return loc, scale


# ---------------------------------------------------------------------------
# Deterministic init mimicking nn.Linear default: U(-1/sqrt(fan_in), +)
# ---------------------------------------------------------------------------
def _torch_style_linear_init(key, fan_in, fan_out, dtype=jnp.float32):
    kw, kb = jax.random.split(key)
    bound = 1.0 / jnp.sqrt(jnp.asarray(fan_in, dtype))
    w = jax.random.uniform(kw, (fan_in, fan_out), dtype, -bound, bound)
    b = jax.random.uniform(kb, (fan_out,), dtype, -bound, bound)
    return w, b


if __name__ == "__main__":
    # Shapes consistent with the module: batch=8, num_feat_in=32, latentD=16.
    B, F, L = 8, 32, 16

    key = jax.random.PRNGKey(0)
    k_x, k_mu, k_lv, k_x2 = jax.random.split(key, 4)

    x = jax.random.normal(k_x, (B, F), jnp.float32)
    w_mu, b_mu = _torch_style_linear_init(k_mu, F, L)
    w_lv, b_lv = _torch_style_linear_init(k_lv, F, L)

    params = prepare_decoder_params(w_mu, b_mu, w_lv, b_lv)   # built once

    loc, scale = normal_dist_decoder(x, params)
    jax.block_until_ready((loc, scale))

    # Reference check against plain JAX (same math as the PyTorch forward).
    loc_ref = x @ w_mu + b_mu
    scale_ref = jax.nn.softplus(x @ w_lv + b_lv)
    assert jnp.allclose(loc, loc_ref, atol=1e-5, rtol=1e-5)
    assert jnp.allclose(scale, scale_ref, atol=1e-5, rtol=1e-5)
    assert bool(jnp.all(scale > 0))          # valid Normal scale

    # Unaligned batch: exercises the multi-step grid + minimal-pad path.
    B2 = 300
    x2 = jax.random.normal(k_x2, (B2, F), jnp.float32)
    loc2, scale2 = normal_dist_decoder(x2, params)
    jax.block_until_ready((loc2, scale2))
    assert jnp.allclose(loc2, x2 @ w_mu + b_mu, atol=1e-5, rtol=1e-5)
    assert jnp.allclose(scale2, jax.nn.softplus(x2 @ w_lv + b_lv), atol=1e-5, rtol=1e-5)
    assert bool(jnp.all(scale2 > 0))

    print("KERNEL_OK")
</pallas_src>

<mosaic_0001>
module attributes {stable_mosaic.version = 11 : i64} {
  func.func @_decoder_kernel(%arg0: i32, %arg1: memref<2x128xf32, #tpu.memory_space<vmem>>, %arg2: memref<128x128xf32, #tpu.memory_space<vmem>>, %arg3: memref<1x128xf32, #tpu.memory_space<vmem>>, %arg4: memref<2x128xf32, #tpu.memory_space<vmem>>) attributes {dimension_semantics = [#tpu.dimension_semantics<parallel>], iteration_bounds = array<i64: 1>, scalar_prefetch = 0 : i64, scratch_operands = 0 : i64, tpu.core_type = #tpu.core_type<tc>, window_params = [{transform_indices = @transform_0, window_bounds = array<i64: 2, 128>}, {pipeline_mode = #tpu.pipeline_mode<synchronous>, transform_indices = @transform_1, window_bounds = array<i64: 128, 128>}, {pipeline_mode = #tpu.pipeline_mode<synchronous>, transform_indices = @transform_2, window_bounds = array<i64: 1, 128>}, {transform_indices = @transform_3, window_bounds = array<i64: 2, 128>}]} {
    %c0 = arith.constant 0 : index
    %c0_0 = arith.constant 0 : index
    %0 = vector.load %arg1[%c0, %c0_0] : memref<2x128xf32, #tpu.memory_space<vmem>>, vector<2x128xf32>
    %c0_1 = arith.constant 0 : index
    %c0_2 = arith.constant 0 : index
    %1 = vector.load %arg2[%c0_1, %c0_2] : memref<128x128xf32, #tpu.memory_space<vmem>>, vector<128x128xf32>
    %cst = arith.constant dense<0.000000e+00> : vector<2x128xf32>
    %2 = tpu.matmul %0, %1, %cst {dimension_numbers = #tpu.dot_dimension_numbers<[1], [0], [0], [1], [0, 0, 1, 1], [], []>} : vector<2x128xf32>, vector<128x128xf32>, vector<2x128xf32> -> vector<2x128xf32>
    %c0_3 = arith.constant 0 : index
    %c0_4 = arith.constant 0 : index
    %3 = vector.load %arg3[%c0_3, %c0_4] : memref<1x128xf32, #tpu.memory_space<vmem>>, vector<1x128xf32>
    %4 = vector.broadcast %3 : vector<1x128xf32> to vector<2x128xf32>
    %5 = arith.addf %2, %4 : vector<2x128xf32>
    %6 = tpu.iota {dimensions = array<i32: 1>} : vector<2x128xi32>
    %c32_i32 = arith.constant 32 : i32
    %c0_i32 = arith.constant 0 : i32
    %7 = arith.cmpi eq, %c32_i32, %c0_i32 : i32
    %c1_i32 = arith.constant 1 : i32
    %8 = arith.select %7, %c1_i32, %c32_i32 : i32
    %9 = vector.broadcast %8 : i32 to vector<2x128xi32>
    %10 = arith.remsi %6, %9 : vector<2x128xi32>
    %c0_i32_5 = arith.constant 0 : i32
    %11 = vector.broadcast %c0_i32_5 : i32 to vector<2x128xi32>
    %12 = arith.cmpi ne, %10, %11 : vector<2x128xi32>
    %c0_i32_6 = arith.constant 0 : i32
    %13 = vector.broadcast %c0_i32_6 : i32 to vector<2x128xi32>
    %14 = arith.cmpi slt, %10, %13 : vector<2x128xi32>
    %c0_i32_7 = arith.constant 0 : i32
    %15 = arith.cmpi slt, %8, %c0_i32_7 : i32
    %16 = vector.broadcast %15 : i1 to vector<2x128xi1>
    %17 = vector.broadcast %16 : vector<2x128xi1> to vector<2x128xi1>
    %18 = arith.xori %14, %17 : vector<2x128xi1>
    %19 = arith.andi %18, %12 : vector<2x128xi1>
    %20 = vector.broadcast %8 : i32 to vector<2x128xi32>
    %21 = arith.addi %10, %20 : vector<2x128xi32>
    %22 = arith.select %19, %21, %10 : vector<2x128xi1>, vector<2x128xi32>
    %c16_i32 = arith.constant 16 : i32
    %23 = vector.broadcast %c16_i32 : i32 to vector<2x128xi32>
    %24 = arith.cmpi sge, %22, %23 : vector<2x128xi32>
    %cst_8 = arith.constant 0.000000e+00 : f32
    %25 = vector.broadcast %cst_8 : f32 to vector<2x128xf32>
    %26 = arith.maximumf %5, %25 : vector<2x128xf32>
    %27 = vector.broadcast %cst_8 : f32 to vector<2x128xf32>
    %28 = arith.subf %5, %27 : vector<2x128xf32>
    %29 = arith.cmpf one, %28, %28 : vector<2x128xf32>
    %30 = vector.broadcast %cst_8 : f32 to vector<2x128xf32>
    %31 = arith.addf %5, %30 : vector<2x128xf32>
    %32 = math.absf %28 : vector<2x128xf32>
    %cst_9 = arith.constant 0.000000e+00 : f32
    %33 = vector.broadcast %cst_9 : f32 to vector<2x128xf32>
    %34 = arith.subf %33, %32 : vector<2x128xf32>
    %35 = math.exp %34 : vector<2x128xf32>
    %36 = math.log1p %35 : vector<2x128xf32>
    %37 = arith.addf %26, %36 : vector<2x128xf32>
    %38 = arith.select %29, %31, %37 : vector<2x128xi1>, vector<2x128xf32>
    %39 = arith.select %24, %38, %5 : vector<2x128xi1>, vector<2x128xf32>
    %c0_10 = arith.constant 0 : index
    %c0_11 = arith.constant 0 : index
    %40 = vector.load %arg4[%c0_10, %c0_11] : memref<2x128xf32, #tpu.memory_space<vmem>>, vector<2x128xf32>
    tpu.vector_store %arg4[%c0_10, %c0_11], %39 {strides = array<i32>} : memref<2x128xf32, #tpu.memory_space<vmem>>, vector<2x128xf32>,
    return
  }
  func.func @transform_0(%arg0: i32) -> (i32, i32) {
    %c0_i32 = arith.constant 0 : i32
    %c0_i32_0 = arith.constant 0 : i32
    return %arg0, %c0_i32 : i32, i32
  }
  func.func @transform_1(%arg0: i32) -> (i32, i32) {
    %c0_i32 = arith.constant 0 : i32
    %c0_i32_0 = arith.constant 0 : i32
    %c0_i32_1 = arith.constant 0 : i32
    return %c0_i32, %c0_i32_0 : i32, i32
  }
  func.func @transform_2(%arg0: i32) -> (i32, i32) {
    %c0_i32 = arith.constant 0 : i32
    %c0_i32_0 = arith.constant 0 : i32
    %c0_i32_1 = arith.constant 0 : i32
    return %c0_i32, %c0_i32_0 : i32, i32
  }
  func.func @transform_3(%arg0: i32) -> (i32, i32) {
    %c0_i32 = arith.constant 0 : i32
    %c0_i32_0 = arith.constant 0 : i32
    return %arg0, %c0_i32 : i32, i32
  }
}

</mosaic_0001>

<llo_original>
// kernel: tpu_custom_call.1
$region0: #{tpu_custom_call.1}
  #allocation0 [shape = 'u32[]', space=smem, size = 0x4, offset = 0x4, fixed_abs, tag = 'smem constant byte address 0x4 - core index']
  #allocation1 [shape = 'u32[144,128]{1,0:T(1,128)}', space=vmem, size = 0x12000, scoped, tag = 'internal scratch']
  %s0 = inlined_call_operand.hbm [shape: f32[2,128], index: 0, kind: input, shape index: {}]
  %s1 = inlined_call_operand.hbm [shape: f32[128,128], index: 1, kind: input, shape index: {}]
  %s2 = inlined_call_operand.vmem [shape: f32[1,128], index: 2, kind: input, shape index: {}]
  %s3 = inlined_call_operand.hbm [shape: f32[2,128], index: 3, kind: output, shape index: {}]
  %s4 = sld [smem:[#allocation0]]
  $region30: #{tpu_custom_call.1} parent=0
    _
  %s6 = ssub.s32 1, %s4
  %s7 = scalar_select 0, %s6, %s4
  $region1: #{tpu_custom_call.1} parent=0
    #allocation2 [shape = 'u8[1024]{0}', space=vmem, size = 0x400, scoped, tag = 'input window, operand 0, single buffered']
    #allocation3 [shape = 's32[1]{0}', space=sflag, size = 0x4, scoped, tag = 'scoped memory for tpu_custom_call.1']
    #allocation4 [shape = 's32[1]{0}', space=sflag, size = 0x4, scoped, tag = 'scoped memory for tpu_custom_call.1']
    #allocation5 [shape = 'u8[65536]{0}', space=vmem, size = 0x10000, scoped, tag = 'input window, operand 1, single buffered']
    #allocation6 [shape = 's32[1]{0}', space=sflag, size = 0x4, scoped, tag = 'scoped memory for tpu_custom_call.1']
    #allocation7 [shape = 'u8[1024]{0}', space=vmem, size = 0x400, scoped, tag = 'output window, operand 0, single buffered']
    %8 = vsyncpa [#allocation3], 0
    %9 = vsyncpa [#allocation6], 0
    %10 = vsyncpa [#allocation4], 0
    // Predicated region
    $region2: #{tpu_custom_call.1} parent=1 // pred_check
      _
    $region3: #{tpu_custom_call.1} parent=1 // pred_check_branch
      %12 = sbr.rel (0) target = $region5
    $region4: #{tpu_custom_call.1} parent=1 // pred_region
      %s14 = ssub.s32 32, 32
      %15 = vsyncadd [#allocation3], %s14
      %s17 = sshll.u32 [#allocation2], 4
      %s18 = int_to_ptr.vmem [resolvable:$true] %s17
      %20 = dma.hbm_to_vmem [thread:$0]  %s0, 32, %s18, [#allocation3]
    $region5: #{tpu_custom_call.1} parent=1 // pred_fallthru
      _
    // Predicated region
    $region6: #{tpu_custom_call.1} parent=1 // pred_check
      _
    $region7: #{tpu_custom_call.1} parent=1 // pred_check_branch
      %22 = sbr.rel (0) target = $region9
    $region8: #{tpu_custom_call.1} parent=1 // pred_region
      %s24 = ssub.s32 2048, 2048
      %25 = vsyncadd [#allocation6], %s24
      %s26 = sshll.u32 [#allocation5], 4
      %s27 = int_to_ptr.vmem [resolvable:$true] %s26
      %32 = dma.hbm_to_vmem [thread:$0]  %s1, 2048, %s27, [#allocation6], 128, 128, 8
    $region9: #{tpu_custom_call.1} parent=1 // pred_fallthru
      _
    // Predicated region
    $region10: #{tpu_custom_call.1} parent=1 // pred_check
      _
    $region11: #{tpu_custom_call.1} parent=1 // pred_check_branch
      %34 = sbr.rel (0) target = $region13
    $region12: #{tpu_custom_call.1} parent=1 // pred_region
      _
    $region13: #{tpu_custom_call.1} parent=1 // pred_fallthru
      _
    // Predicated region
    $region14: #{tpu_custom_call.1} parent=1 // pred_check
      _
    $region15: #{tpu_custom_call.1} parent=1 // pred_check_branch
      %36 = sbr.rel (0) target = $region17
    $region16: #{tpu_custom_call.1} parent=1 // pred_region
      %37 = dma.done [#allocation3], 32
    $region17: #{tpu_custom_call.1} parent=1 // pred_fallthru
      _
    // Predicated region
    $region18: #{tpu_custom_call.1} parent=1 // pred_check
      _
    $region19: #{tpu_custom_call.1} parent=1 // pred_check_branch
      %39 = sbr.rel (0) target = $region21
    $region20: #{tpu_custom_call.1} parent=1 // pred_region
      %40 = dma.done [#allocation6], 2048
    $region21: #{tpu_custom_call.1} parent=1 // pred_fallthru
      _
    %v41 = vld [vmem:[#allocation2] sm:$0x3]
    %v42 = vld [vmem:[#allocation5] sm:$0xff]
    %v43 = vld [vmem:[#allocation5 + $0x8] sm:$0xff]
    %v44 = vld [vmem:[#allocation5 + $0x10] sm:$0xff]
    %v45 = vld [vmem:[#allocation5 + $0x18] sm:$0xff]
    %v46 = vld [vmem:[#allocation5 + $0x20] sm:$0xff]
    %v47 = vld [vmem:[#allocation5 + $0x28] sm:$0xff]
    %v48 = vld [vmem:[#allocation5 + $0x30] sm:$0xff]
    %v49 = vld [vmem:[#allocation5 + $0x38] sm:$0xff]
    %v50 = vld [vmem:[#allocation5 + $0x40] sm:$0xff]
    %v51 = vld [vmem:[#allocation5 + $0x48] sm:$0xff]
    %v52 = vld [vmem:[#allocation5 + $0x50] sm:$0xff]
    %v53 = vld [vmem:[#allocation5 + $0x58] sm:$0xff]
    %v54 = vld [vmem:[#allocation5 + $0x60] sm:$0xff]
    %v55 = vld [vmem:[#allocation5 + $0x68] sm:$0xff]
    %v56 = vld [vmem:[#allocation5 + $0x70] sm:$0xff]
    %v57 = vld [vmem:[#allocation5 + $0x78] sm:$0xff]
    %v58 = vld [vmem:[%s2] sm:$0x1]
    %v60 = vlaneseq
    %v61 = vshrl.u32 %v60, 7
    %v62 = vsub.s32 0, %v61
    %v63 = vrot.slane %v58, %v62
    %65 = vmatprep.subr.mxu0 0.0
    %66 = vmatpush1.msra.mxu0 %v42
    %67 = vmatprep.subr.mxu0 0.0
    %68 = vmatpush1.msra.mxu0 %v43
    %69 = vmatprep.subr.mxu0 0.0
    %70 = vmatpush1.msra.mxu0 %v44
    %71 = vmatprep.subr.mxu0 0.0
    %72 = vmatpush1.msra.mxu0 %v45
    %73 = vmatprep.subr.mxu0 0.0
    %74 = vmatpush1.msra.mxu0 %v46
    %75 = vmatprep.subr.mxu0 0.0
    %76 = vmatpush1.msra.mxu0 %v47
    %77 = vmatprep.subr.mxu0 0.0
    %78 = vmatpush1.msra.mxu0 %v48
    %79 = vmatprep.subr.mxu0 0.0
    %80 = vmatpush1.msra.mxu0 %v49
    %81 = vmatprep.subr.mxu0 0.0
    %82 = vmatpush1.msra.mxu0 %v50
    %83 = vmatprep.subr.mxu0 0.0
    %84 = vmatpush1.msra.mxu0 %v51
    %85 = vmatprep.subr.mxu0 0.0
    %86 = vmatpush1.msra.mxu0 %v52
    %87 = vmatprep.subr.mxu0 0.0
    %88 = vmatpush1.msra.mxu0 %v53
    %89 = vmatprep.subr.mxu0 0.0
    %90 = vmatpush1.msra.mxu0 %v54
    %91 = vmatprep.subr.mxu0 0.0
    %92 = vmatpush1.msra.mxu0 %v55
    %93 = vmatprep.subr.mxu0 0.0
    %94 = vmatpush1.msra.mxu0 %v56
    %95 = vmatprep.subr.mxu0 0.0
    %96 = vmatpush1.msra.mxu0 %v57
    %97 = vmatprep.subr.mxu0 0.0
    %98 = vmatpush1.msra.mxu0 0.0
    %99 = vmatprep.subr.mxu0 0.0
    %100 = vmatpush1.msra.mxu0 0.0
    %101 = vmatprep.subr.mxu0 0.0
    %102 = vmatpush1.msra.mxu0 0.0
    %103 = vmatprep.subr.mxu0 0.0
    %104 = vmatpush1.msra.mxu0 0.0
    %105 = vmatprep.subr.mxu0 0.0
    %106 = vmatpush1.msra.mxu0 0.0
    %107 = vmatprep.subr.mxu0 0.0
    %108 = vmatpush1.msra.mxu0 0.0
    %109 = vmatprep.subr.mxu0 0.0
    %110 = vmatpush1.msra.mxu0 0.0
    %111 = vmatprep.subr.mxu0 0.0
    %112 = vmatpush1.msra.mxu0 0.0
    %113 = vmatprep.subr.mxu0 0.0
    %114 = vmatpush1.msra.mxu0 0.0
    %115 = vmatprep.subr.mxu0 0.0
    %116 = vmatpush1.msra.mxu0 0.0
    %117 = vmatprep.subr.mxu0 0.0
    %118 = vmatpush1.msra.mxu0 0.0
    %119 = vmatprep.subr.mxu0 0.0
    %120 = vmatpush1.msra.mxu0 0.0
    %121 = vmatprep.subr.mxu0 0.0
    %122 = vmatpush1.msra.mxu0 0.0
    %123 = vmatprep.subr.mxu0 0.0
    %124 = vmatpush1.msra.mxu0 0.0
    %125 = vmatprep.subr.mxu0 0.0
    %126 = vmatpush1.msra.mxu0 0.0
    %127 = vmatprep.subr.mxu0 0.0
    %128 = vmatpush1.msra.mxu0 0.0
    %129 = vmatprep.mubr.f32.mxu0 0.0
    %130 = vmatmul.mubr.f32.gmra.mrb[0].mxu0 %v41
    %v131 = vpop.f32.mrb[0].mxu0
    %v132 = vadd.f32 %v63, %v131
    %v133 = vpop.f32.mrb[0].mxu0
    %134 = vdwg.mxu0
    %v135 = vlaneseq
    %v136 = vand.u32 %v135, 127
    %vm137 = vcmp.lt.s32.totalorder %v136, 0
    %v138 = vsub.s32 0, %v136
    %v139 = vsel %vm137, %v138, %v136
    %v140 = vshrl.u32 %v139, 5
    %v141 = vand.u32 %v139, 31
    %v142 = vsub.s32 0, %v141
    %v143 = vsel %vm137, %v142, %v141
    %vm144 = vcmp.ne.s32.totalorder %v143, 0
    %vm145 = vcmp.lt.s32.totalorder %v143, 0
    %vm146 = vmand %vm145, %vm144
    %v147 = vadd.s32 %v143, 32
    %v148 = vsel %vm146, %v147, %v143
    %vm149 = vcmp.ge.s32.totalorder %v148, 16
    %v150 = vmax.f32 %v132, 0.0
    %vm151 = vcmp.ne.f32.partialorder %v132, %v132
    %v152 = vadd.f32 %v132, 0.0
    %v153 = vand.u32 2147483647, %v132
    %v154 = vsub.f32 0.0, %v153
    %v155 = vmul.f32 %v154, 1.442695
    %v156 = vpow.pop %v155
    %v157 = vadd.f32 %v156, 1.0
    %v158 = vlog2.pop %v157
    %v159 = vmul.f32 %v158, 0.6931472
    %v160 = vmul.f32 -0.5, %v156
    %v161 = vadd.f32 %v160, 1.0
    %v162 = vmul.f32 %v161, %v156
    %v163 = vand.u32 2147483647, %v156
    %vm164 = vcmp.lt.f32.partialorder %v163, 0.0004427343
    %v165 = vsel %vm164, %v162, %v159
    %v166 = vadd.f32 %v150, %v165
    %v167 = vsel %vm151, %v152, %v166
    %v168 = vsel %vm149, %v167, %v132
    %169 = vst [vmem:[#allocation7] sm:$0x3] %v168
    // Predicated region
    $region22: #{tpu_custom_call.1} parent=1 // pred_check
      _
    $region23: #{tpu_custom_call.1} parent=1 // pred_check_branch
      %171 = sbr.rel (0) target = $region25
    $region24: #{tpu_custom_call.1} parent=1 // pred_region
      %s173 = ssub.s32 32, 32
      %174 = vsyncadd [#allocation4], %s173
      %s176 = sshll.u32 [#allocation7], 4
      %s177 = int_to_ptr.vmem [resolvable:$true] %s176
      %179 = dma.vmem_to_hbm [thread:$0]  %s177, 32, %s3, [#allocation4]
    $region25: #{tpu_custom_call.1} parent=1 // pred_fallthru
      _
    // Predicated region
    $region26: #{tpu_custom_call.1} parent=1 // pred_check
      _
    $region27: #{tpu_custom_call.1} parent=1 // pred_check_branch
      %181 = sbr.rel (0) target = $region29
    $region28: #{tpu_custom_call.1} parent=1 // pred_region
      %182 = dma.done [#allocation4], 32
    $region29: #{tpu_custom_call.1} parent=1 // pred_fallthru
      _
    %183 = vsyncpa [#allocation3], 1
    %184 = vsyncpa [#allocation6], 1
    %185 = vsyncpa [#allocation4], 1

</llo_original>
